<compile_context>
chip_gen: v5e
topology: v5e:2x2
jax: 0.10.0
libtpu: 0.0.40
codegen_flags: <defaults>
</compile_context>

<pallas_src>
import jax
import jax.numpy as jnp
from jax.experimental import pallas as pl
from jax.experimental.pallas import tpu as pltpu


def _seq_pool_kernel(x_ref, w_ref, o_ref):
    # x_ref: (TB, S, D) VMEM    w_ref: (1, D) VMEM    o_ref: (TB, D) VMEM
    x = x_ref[...].astype(jnp.float32)                     # (TB, S, D)
    w = w_ref[...]                                          # (1, D) f32

    # Attention scores, lane-dense (TB, S): broadcast-multiply over D (VPU)
    # + lane-axis reduce (XLU).  No MXU, no width-1 lane layouts.
    scores = jnp.sum(x * w[:, None, :], axis=-1)            # (TB, S)

    # Numerically-stable softmax over the sequence axis (PyTorch dim=1).
    # The Linear bias is a single scalar added to every score, so it cancels
    # exactly under softmax (shift invariance) and is omitted here.
    m = jnp.max(scores, axis=-1, keepdims=True)             # (TB, 1)
    e = jnp.exp(scores - m)                                  # (TB, S)
    denom = jnp.sum(e, axis=-1, keepdims=True)               # (TB, 1)
    r = pl.reciprocal(denom, approx=True)                    # EUP slot
    r = r * (2.0 - denom * r)                                # one Newton step
    attn = e * r                                             # (TB, S), f32

    # Weighted sum over S on the VPU/XLU (fully hidden under the HBM DMA).
    # attn stays f32 -> f32 accumulation even for bf16 inputs.
    pooled = jnp.sum(attn[:, :, None] * x, axis=1)           # (TB, D) f32
    o_ref[...] = pooled.astype(o_ref.dtype)


def _vmem_budgets():
    """Generation-aware (tile_budget, vmem_limit) in bytes.

    v7x has 64 MiB VMEM per TensorCore (vs 128 MiB on v5e/v6e); leave room
    for the double-buffered input slab, output buffers and fused-elementwise
    intermediates.
    """
    try:
        cap = int(pltpu.get_tpu_info().vmem_capacity_bytes)
    except Exception:
        cap = 64 * 1024 * 1024            # conservative: v7x per-TC capacity
    tile_budget = max(2 * 1024 * 1024, min(16 * 1024 * 1024, cap // 6))
    vmem_limit = max(32 * 1024 * 1024,
                     min(cap - 16 * 1024 * 1024, 96 * 1024 * 1024))
    return tile_budget, vmem_limit


def _pick_block_b(batch, seq, dim, itemsize, tile_budget_bytes,
                  min_grid_steps=4):
    """Largest batch tile whose (block_b, S, D) slab fits the per-buffer VMEM
    budget, keeping >= min_grid_steps grid steps (pipeline overlap + both
    v7x TensorCores busy) and preferring sublane-aligned divisors of B."""
    per_row = max(1, seq * dim * itemsize)
    tb = int(max(1, tile_budget_bytes // per_row))
    if batch >= min_grid_steps:
        tb = min(tb, max(1, batch // min_grid_steps))
    if tb >= batch:
        return batch                       # full dim -> always layout-legal
    # Prefer a multiple-of-8 tile that divides the batch (no masked edge).
    probe = (tb // 8) * 8
    while probe >= 8:
        if batch % probe == 0:
            return probe
        probe -= 8
    # Fall back: sublane-aligned tile with a masked edge block (cdiv grid).
    return min(max((tb // 8) * 8, 8), batch)


def seq_pooling(x, w, b=None, *, tile_budget_bytes=None, vmem_limit_bytes=None):
    """x: (B, S, D); w: (1, D) (nn.Linear weight); b unused (cancels under
    softmax, kept for interface parity). Returns attention-pooled (B, D)."""
    B, S, D = x.shape
    w = jnp.asarray(w, jnp.float32).reshape(1, D)      # lane-dense, f32

    tb_def, vl_def = _vmem_budgets()
    if tile_budget_bytes is None:
        tile_budget_bytes = tb_def
    if vmem_limit_bytes is None:
        vmem_limit_bytes = vl_def

    block_b = _pick_block_b(B, S, D, x.dtype.itemsize, tile_budget_bytes)
    grid = (pl.cdiv(B, block_b),)

    cost = pl.CostEstimate(
        flops=4 * B * S * D,                # score mul/add + pooled mul/add
        transcendentals=B * S,              # exp
        bytes_accessed=(x.size * x.dtype.itemsize
                        + w.size * 4
                        + B * D * x.dtype.itemsize),
    )

    return pl.pallas_call(
        _seq_pool_kernel,
        out_shape=jax.ShapeDtypeStruct((B, D), x.dtype),
        grid_spec=pltpu.PrefetchScalarGridSpec(
            num_scalar_prefetch=0,
            grid=grid,
            in_specs=[
                # Multi-row batch slab per step.
                pl.BlockSpec((block_b, S, D), lambda i: (i, 0, 0)),
                # Lane-dense weight, constant index_map -> resident in VMEM.
                pl.BlockSpec((1, D), lambda i: (0, 0)),
            ],
            # Flat, lane-dense 2-D output slab.
            out_specs=pl.BlockSpec((block_b, D), lambda i: (i, 0)),
        ),
        compiler_params=pltpu.CompilerParams(
            dimension_semantics=("parallel",),   # shards batch steps on v7x
            vmem_limit_bytes=int(vmem_limit_bytes),
        ),
        cost_estimate=cost,
    )(x, w)


def seq_pooling_ref(x, w, b):
    # nn.Linear(D, 1): scores = x @ w.T + b, then softmax over dim=1.
    scores = jnp.einsum("bsd,od->bso", x, w) + b       # (B, S, 1)
    attn = jax.nn.softmax(scores, axis=1)
    return jnp.sum(attn * x, axis=1)                   # (B, D)


if __name__ == "__main__":
    B, S, D = 2, 8, 32
    key = jax.random.PRNGKey(0)
    kx, kw, kb = jax.random.split(key, 3)

    x = jax.random.normal(kx, (B, S, D), dtype=jnp.float32)
    # Deterministic "Linear(embed_dim, 1)" params (PyTorch-style uniform init).
    bound = 1.0 / jnp.sqrt(jnp.float32(D))
    w = jax.random.uniform(kw, (1, D), minval=-bound, maxval=bound,
                           dtype=jnp.float32)
    b = jax.random.uniform(kb, (1,), minval=-bound, maxval=bound,
                           dtype=jnp.float32)

    out = jax.block_until_ready(seq_pooling(x, w, b))
    ref = jax.block_until_ready(seq_pooling_ref(x, w, b))

    assert out.shape == (B, D)
    err = float(jnp.max(jnp.abs(out - ref)))
    # Tolerance leaves margin for the EUP-seeded (Newton-refined) reciprocal.
    assert jnp.allclose(out, ref, atol=1e-4, rtol=1e-4), err
    print("KERNEL_OK")
</pallas_src>

<mosaic_0001>
module attributes {stable_mosaic.version = 11 : i64} {
  func.func @_seq_pool_kernel(%arg0: i32, %arg1: memref<2x8x32xf32, #tpu.memory_space<vmem>>, %arg2: memref<1x32xf32, #tpu.memory_space<vmem>>, %arg3: memref<2x32xf32, #tpu.memory_space<vmem>>) attributes {dimension_semantics = [#tpu.dimension_semantics<parallel>], iteration_bounds = array<i64: 1>, scalar_prefetch = 0 : i64, scratch_operands = 0 : i64, tpu.core_type = #tpu.core_type<tc>, window_params = [{transform_indices = @transform_0, window_bounds = array<i64: 2, 8, 32>}, {pipeline_mode = #tpu.pipeline_mode<synchronous>, transform_indices = @transform_1, window_bounds = array<i64: 1, 32>}, {transform_indices = @transform_2, window_bounds = array<i64: 2, 32>}]} {
    %c0 = arith.constant 0 : index
    %c0_0 = arith.constant 0 : index
    %c0_1 = arith.constant 0 : index
    %0 = vector.load %arg1[%c0, %c0_0, %c0_1] : memref<2x8x32xf32, #tpu.memory_space<vmem>>, vector<2x8x32xf32>
    %c0_2 = arith.constant 0 : index
    %c0_3 = arith.constant 0 : index
    %1 = vector.load %arg2[%c0_2, %c0_3] : memref<1x32xf32, #tpu.memory_space<vmem>>, vector<1x32xf32>
    %2 = vector.shape_cast %1 : vector<1x32xf32> to vector<1x1x32xf32>
    %3 = vector.broadcast %2 : vector<1x1x32xf32> to vector<2x8x32xf32>
    %4 = arith.mulf %0, %3 : vector<2x8x32xf32>
    %cst = arith.constant dense<0.000000e+00> : vector<2x8xf32>
    %5 = vector.multi_reduction <add>, %4, %cst [2] : vector<2x8x32xf32> to vector<2x8xf32>
    %cst_4 = arith.constant dense<0xFF800000> : vector<2xf32>
    %6 = vector.multi_reduction <maximumf>, %5, %cst_4 [1] : vector<2x8xf32> to vector<2xf32>
    %7 = vector.shape_cast %6 : vector<2xf32> to vector<2x1xf32>
    %8 = vector.broadcast %7 : vector<2x1xf32> to vector<2x8xf32>
    %9 = arith.subf %5, %8 : vector<2x8xf32>
    %10 = math.exp %9 : vector<2x8xf32>
    %cst_5 = arith.constant dense<0.000000e+00> : vector<2xf32>
    %11 = vector.multi_reduction <add>, %10, %cst_5 [1] : vector<2x8xf32> to vector<2xf32>
    %12 = vector.shape_cast %11 : vector<2xf32> to vector<2x1xf32>
    %13 = tpu.reciprocal %12 {approx = true} : vector<2x1xf32> -> vector<2x1xf32>
    %14 = arith.mulf %12, %13 : vector<2x1xf32>
    %cst_6 = arith.constant 2.000000e+00 : f32
    %15 = vector.broadcast %cst_6 : f32 to vector<2x1xf32>
    %16 = arith.subf %15, %14 : vector<2x1xf32>
    %17 = arith.mulf %13, %16 : vector<2x1xf32>
    %18 = vector.broadcast %17 : vector<2x1xf32> to vector<2x8xf32>
    %19 = arith.mulf %10, %18 : vector<2x8xf32>
    %20 = vector.shape_cast %19 : vector<2x8xf32> to vector<2x8x1xf32>
    %21 = vector.broadcast %20 : vector<2x8x1xf32> to vector<2x8x32xf32>
    %22 = arith.mulf %21, %0 : vector<2x8x32xf32>
    %cst_7 = arith.constant dense<0.000000e+00> : vector<2x32xf32>
    %23 = vector.multi_reduction <add>, %22, %cst_7 [1] : vector<2x8x32xf32> to vector<2x32xf32>
    %c0_8 = arith.constant 0 : index
    %c0_9 = arith.constant 0 : index
    %24 = vector.load %arg3[%c0_8, %c0_9] : memref<2x32xf32, #tpu.memory_space<vmem>>, vector<2x32xf32>
    tpu.vector_store %arg3[%c0_8, %c0_9], %23 {strides = array<i32>} : memref<2x32xf32, #tpu.memory_space<vmem>>, vector<2x32xf32>,
    return
  }
  func.func @transform_0(%arg0: i32) -> (i32, i32, i32) {
    %c0_i32 = arith.constant 0 : i32
    %c0_i32_0 = arith.constant 0 : i32
    %c0_i32_1 = arith.constant 0 : i32
    return %arg0, %c0_i32, %c0_i32_0 : i32, i32, i32
  }
  func.func @transform_1(%arg0: i32) -> (i32, i32) {
    %c0_i32 = arith.constant 0 : i32
    %c0_i32_0 = arith.constant 0 : i32
    %c0_i32_1 = arith.constant 0 : i32
    return %c0_i32, %c0_i32_0 : i32, i32
  }
  func.func @transform_2(%arg0: i32) -> (i32, i32) {
    %c0_i32 = arith.constant 0 : i32
    %c0_i32_0 = arith.constant 0 : i32
    return %arg0, %c0_i32 : i32, i32
  }
}

</mosaic_0001>

<llo_original>
// kernel: tpu_custom_call.1
$region0: #{tpu_custom_call.1}
  #allocation0 [shape = 'u32[]', space=smem, size = 0x4, offset = 0x4, fixed_abs, tag = 'smem constant byte address 0x4 - core index']
  #allocation1 [shape = 'u32[72,128]{1,0:T(1,128)}', space=vmem, size = 0x9000, scoped, tag = 'internal scratch']
  %s0 = inlined_call_operand.hbm [shape: f32[2,8,32], index: 0, kind: input, shape index: {}]
  %s1 = inlined_call_operand.hbm [shape: f32[1,32], index: 1, kind: input, shape index: {}]
  %s2 = inlined_call_operand.hbm [shape: f32[2,32], index: 2, kind: output, shape index: {}]
  %s3 = sld [smem:[#allocation0]]
  $region26: #{tpu_custom_call.1} parent=0
    _
  %s5 = ssub.s32 1, %s3
  %s6 = scalar_select 0, %s5, %s3
  $region1: #{tpu_custom_call.1} parent=0
    #allocation2 [shape = 'u8[8192]{0}', space=vmem, size = 0x2000, scoped, tag = 'input window, operand 0, single buffered']
    #allocation3 [shape = 's32[1]{0}', space=sflag, size = 0x4, scoped, tag = 'scoped memory for tpu_custom_call.1']
    #allocation4 [shape = 's32[1]{0}', space=sflag, size = 0x4, scoped, tag = 'scoped memory for tpu_custom_call.1']
    #allocation5 [shape = 'u8[512]{0}', space=vmem, size = 0x400, scoped, tag = 'input window, operand 1, single buffered']
    #allocation6 [shape = 's32[1]{0}', space=sflag, size = 0x4, scoped, tag = 'scoped memory for tpu_custom_call.1']
    #allocation7 [shape = 'u8[1024]{0}', space=vmem, size = 0x400, scoped, tag = 'output window, operand 0, single buffered']
    %7 = vsyncpa [#allocation3], 0
    %8 = vsyncpa [#allocation6], 0
    %9 = vsyncpa [#allocation4], 0
    // Predicated region
    $region2: #{tpu_custom_call.1} parent=1 // pred_check
      _
    $region3: #{tpu_custom_call.1} parent=1 // pred_check_branch
      %11 = sbr.rel (0) target = $region5
    $region4: #{tpu_custom_call.1} parent=1 // pred_region
      %13 = vsyncadd [#allocation3], 0
      %s14 = sshll.u32 %s0, 4
      %s15 = int_to_ptr.hbm [resolvable:$true] %s14
      %s16 = sshll.u32 [#allocation2], 4
      %s17 = int_to_ptr.vmem [resolvable:$true] %s16
      %22 = dma.hbm_to_vmem [thread:$0]  %s15, 256, %s17, [#allocation3], 128, 128, 8
    $region5: #{tpu_custom_call.1} parent=1 // pred_fallthru
      _
    // Predicated region
    $region6: #{tpu_custom_call.1} parent=1 // pred_check
      _
    $region7: #{tpu_custom_call.1} parent=1 // pred_check_branch
      %24 = sbr.rel (0) target = $region9
    $region8: #{tpu_custom_call.1} parent=1 // pred_region
      %26 = vsyncadd [#allocation6], 0
      %s28 = sshll.u32 %s1, 4
      %s29 = int_to_ptr.hbm [resolvable:$true] %s28
      %s30 = sshll.u32 [#allocation5], 4
      %s31 = int_to_ptr.vmem [resolvable:$true] %s30
      %33 = dma.hbm_to_vmem [thread:$0]  %s29, 16, %s31, [#allocation6]
    $region9: #{tpu_custom_call.1} parent=1 // pred_fallthru
      _
    // Predicated region
    $region10: #{tpu_custom_call.1} parent=1 // pred_check
      _
    $region11: #{tpu_custom_call.1} parent=1 // pred_check_branch
      %35 = sbr.rel (0) target = $region13
    $region12: #{tpu_custom_call.1} parent=1 // pred_region
      %37 = dma.done [#allocation3], 256
    $region13: #{tpu_custom_call.1} parent=1 // pred_fallthru
      _
    // Predicated region
    $region14: #{tpu_custom_call.1} parent=1 // pred_check
      _
    $region15: #{tpu_custom_call.1} parent=1 // pred_check_branch
      %39 = sbr.rel (0) target = $region17
    $region16: #{tpu_custom_call.1} parent=1 // pred_region
      %41 = dma.done [#allocation6], 16
    $region17: #{tpu_custom_call.1} parent=1 // pred_fallthru
      _
    %v42 = vld [vmem:[#allocation2] sm:$0xff]
    %v43 = vld [vmem:[#allocation2 + $0x8] sm:$0xff]
    %v44 = vld [vmem:[#allocation5] sm:$0x1]
    %v46 = vperm.slane %v44, 0
    %v48 = vmul.f32 %v42, %v46
    %v49 = vmul.f32 %v43, %v46
    %vm50 = vcmask 261120
    %v51 = vsel %vm50, %v48, 0.0
    %52 = vadd.xlane.f32.xlu0 %v51
    %v53 = vpop.xlane.xlu0 %52
    %v54 = vsel %vm50, %v49, 0.0
    %55 = vadd.xlane.f32.xlu0 %v54
    %v56 = vpop.xlane.xlu0 %55
    %v59 = vlaneseq
    %v60 = vand.u32 %v59, 127
    %v61 = vperm.slane %v53, %v60
    %v62 = vperm.slane %v56, %v60
    %vm63 = vcmask 1041409
    %v64 = vsel %vm63, %v62, %v61
    %vm66 = vcmask 58368
    %v67 = vsel %vm66, %v64, -inf
    %68 = vmax.xlane.f32.xlu0 %v67
    %v69 = vpop.xlane.xlu0 %68
    %v71 = vperm.slane %v69, 0
    %v72 = vperm.slane %v69, 1
    %v75 = vsub.f32 %v53, %v71
    %v76 = vsub.f32 %v56, %v72
    %v77 = vmul.f32 %v75, 1.442695
    %v78 = vpow.pop %v77
    %v79 = vmul.f32 %v76, 1.442695
    %v80 = vpow.pop %v79
    %83 = vset.pattern.permute.xlu0 0
    %84 = vperm.xlu0 %83, %v78
    %v85 = vpop.permute.xlu0 %84
    %86 = vset.pattern.permute.xlu0 0
    %87 = vperm.xlu0 %86, %v80
    %v88 = vpop.permute.xlu0 %87
    %v89 = vperm.slane %v85, %v60
    %v90 = vperm.slane %v88, %v60
    %v91 = vsel %vm63, %v90, %v89
    %v93 = vsel %vm66, %v91, 0.0
    %94 = vadd.xlane.f32.xlu0 %v93
    %v95 = vpop.xlane.xlu0 %94
    %v96 = vrcp.pop %v95
    %v97 = vmul.f32 %v95, %v96
    %v98 = vsub.f32 2.0, %v97
    %v99 = vmul.f32 %v96, %v98
    %v101 = vperm.slane %v99, 0
    %v102 = vperm.slane %v99, 1
    %v105 = vmul.f32 %v78, %v101
    %v106 = vmul.f32 %v80, %v102
    %108 = vset.pattern.permute.xlu0 0
    %109 = vperm.xlu0 %108, %v105
    %v110 = vpop.permute.xlu0 %109
    %113 = vset.pattern.permute.xlu0 0
    %114 = vperm.xlu0 %113, %v106
    %v115 = vpop.permute.xlu0 %114
    %v117 = vmul.f32 %v110, %v42
    %v118 = vmul.f32 %v115, %v43
    %v119 = vsel %vm50, %v117, 0.0
    %v120 = vrot.slane %v119, 4
    %v121 = vadd.f32 %v119, %v120
    %v122 = vrot.slane %v121, 2
    %v123 = vadd.f32 %v121, %v122
    %v124 = vrot.slane %v123, 1
    %v125 = vadd.f32 %v123, %v124
    %v126 = vsel %vm50, %v118, 0.0
    %v127 = vrot.slane %v126, 4
    %v128 = vadd.f32 %v126, %v127
    %v129 = vrot.slane %v128, 2
    %v130 = vadd.f32 %v128, %v129
    %v131 = vrot.slane %v130, 1
    %v132 = vadd.f32 %v130, %v131
    %v135 = vsel %vm63, %v132, %v125
    %vm137 = vcmask 254976
    %138 = vst.msk [vmem:[#allocation7] sm:$0x3] %vm137, %v135
    // Predicated region
    $region18: #{tpu_custom_call.1} parent=1 // pred_check
      _
    $region19: #{tpu_custom_call.1} parent=1 // pred_check_branch
      %140 = sbr.rel (0) target = $region21
    $region20: #{tpu_custom_call.1} parent=1 // pred_region
      %142 = vsyncadd [#allocation4], 0
      %s144 = sshll.u32 [#allocation7], 4
      %s145 = int_to_ptr.vmem [resolvable:$true] %s144
      %s146 = sshll.u32 %s2, 4
      %s147 = int_to_ptr.hbm [resolvable:$true] %s146
      %149 = dma.vmem_to_hbm [thread:$0]  %s145, 32, %s147, [#allocation4]
    $region21: #{tpu_custom_call.1} parent=1 // pred_fallthru
      _
    // Predicated region
    $region22: #{tpu_custom_call.1} parent=1 // pred_check
      _
    $region23: #{tpu_custom_call.1} parent=1 // pred_check_branch
      %151 = sbr.rel (0) target = $region25
    $region24: #{tpu_custom_call.1} parent=1 // pred_region
      %153 = dma.done [#allocation4], 32
    $region25: #{tpu_custom_call.1} parent=1 // pred_fallthru
      _
    %154 = vsyncpa [#allocation3], 1
    %155 = vsyncpa [#allocation6], 1
    %156 = vsyncpa [#allocation4], 1

</llo_original>
